<compile_context>
chip_gen: v5e
topology: v5e:2x2
jax: 0.10.0
libtpu: 0.0.40
codegen_flags: <defaults>
</compile_context>

<pallas_src>
import functools

import jax
import jax.numpy as jnp
from jax import lax
from jax.experimental import pallas as pl
from jax.experimental.pallas import tpu as pltpu


def _bottleneck_kernel(x_ref, w1_ref, b1_ref, w2_ref, b2_ref, w3_ref, b3_ref,
                       mask_ref, out_ref, *, H, W):
    """One grid step = one image; channels in sublanes, flat H*W in lanes.

    x_ref   : (Cin, S)    S = H*W
    w1_ref  : (Pp, Cin)   conv1 1x1 weight, bn1 scale folded, planes padded to Pp
    b1_ref  : (Pp, 1)     bn1 folded bias (zero in padded rows)
    w2_ref  : (Pp, 9*Pp)  conv2 3x3 weight in im2col layout, bn2 scale folded
    b2_ref  : (Pp, 1)     bn2 folded bias
    w3_ref  : (Cin, Pp)   conv3 1x1 weight with bn3 scale + index_add_ scatter folded
    b3_ref  : (Cin, 1)    bn3 folded bias scattered into residual channels
    mask_ref: (9, S)      0/1 padding mask, one row per 3x3 tap
    out_ref : (Cin, S)
    """
    f32 = jnp.float32
    S = H * W
    x = x_ref[...]                                                   # (Cin, S)

    # conv1 (1x1) + bn1 + relu: one matmul over the whole image.
    h1 = jnp.dot(w1_ref[...], x, preferred_element_type=f32)         # (Pp, S)
    h1 = jnp.maximum(h1 + b1_ref[...], 0.0)

    # conv2 (3x3, stride 1, pad 1) via im2col on the flat spatial axis:
    # tap (di, dj) is a lane rotation by di*W + dj (XLU, off the VALU path);
    # out-of-image positions are zeroed by the per-tap mask row, which also
    # kills any cross-row / wrap-around bleed from the rotation.
    mask = mask_ref[...]                                             # (9, S)
    taps = []
    t = 0
    for di in (-1, 0, 1):
        for dj in (-1, 0, 1):
            off = di * W + dj
            if off == 0:
                taps.append(h1)                                      # center: mask == 1
            else:
                rolled = pltpu.roll(h1, shift=(-off) % S, axis=1)
                taps.append(rolled * mask[t].reshape(1, S))
            t += 1
    patches = jnp.concatenate(taps, axis=0)                          # (9*Pp, S)

    h2 = jnp.dot(w2_ref[...], patches, preferred_element_type=f32)   # (Pp, S)
    h2 = jnp.maximum(h2 + b2_ref[...], 0.0)

    # conv3 (1x1) + bn3 + index_add_ (all folded into w3f/b3f), residual + relu.
    y = jnp.dot(w3_ref[...], h2, preferred_element_type=f32)         # (Cin, S)
    out_ref[...] = jnp.maximum(x + y + b3_ref[...], 0.0)


def bottleneck_pallas(x_nchw, params, index, eps=1e-5):
    """x_nchw: (N, Cin, H, W) float32, PyTorch layout. Returns NCHW."""
    N, Cin, H, W = x_nchw.shape
    S = H * W
    x = x_nchw.reshape(N, Cin, S).astype(jnp.float32)                # (N, Cin, S)

    def fold_bn(gamma, beta, mean, var):
        scale = (gamma / jnp.sqrt(var + eps)).astype(jnp.float32)
        bias = (beta - mean * scale).astype(jnp.float32)
        return scale, bias

    s1, b1 = fold_bn(*params["bn1"])
    s2, b2 = fold_bn(*params["bn2"])
    s3, b3 = fold_bn(*params["bn3"])

    # PyTorch conv weights are OIHW.
    w1 = params["w1"][:, :, 0, 0].astype(jnp.float32)                # (P, Cin)
    w2 = params["w2"].astype(jnp.float32)                            # (P, P, 3, 3)
    w3 = params["w3"][:, :, 0, 0].astype(jnp.float32)                # (Pe, P)
    P = w1.shape[0]
    Pp = -(-P // 8) * 8   # pad planes to a sublane multiple (8)

    # conv1: fold bn1 scale, zero-pad planes to Pp (padded rows produce
    # relu(0) = 0 and their conv2/conv3 weight columns are zero, so padding is
    # semantics-neutral).
    w1f = jnp.zeros((Pp, Cin), jnp.float32).at[:P].set(s1[:, None] * w1)
    b1f = jnp.zeros((Pp, 1), jnp.float32).at[:P, 0].set(b1)

    # conv2 im2col weight: column block t = kh*3 + kw holds w2[:, :, kh, kw];
    # both plane dims zero-padded to Pp so the in-kernel concat is tile-aligned.
    w2_t = jnp.transpose(w2, (0, 2, 3, 1))                           # (P, 3, 3, P)
    w2_pad = jnp.zeros((Pp, 3, 3, Pp), jnp.float32).at[:P, :, :, :P].set(
        s2[:, None, None, None] * w2_t)
    w2f = w2_pad.reshape(Pp, 9 * Pp)                                 # (Pp, 9*Pp)
    b2f = jnp.zeros((Pp, 1), jnp.float32).at[:P, 0].set(b2)

    # conv3: fold bn3 scale + one-hot scatter (index_add_, duplicates sum).
    scat = jax.nn.one_hot(index, Cin, dtype=jnp.float32)             # (Pe, Cin)
    w3f = jnp.zeros((Cin, Pp), jnp.float32).at[:, :P].set(scat.T @ (s3[:, None] * w3))
    b3f = (scat.T @ b3)[:, None]                                     # (Cin, 1)

    # Compact padding mask: one row per 3x3 tap (row order matches w2f blocks).
    hh, ww = jnp.meshgrid(jnp.arange(H), jnp.arange(W), indexing="ij")
    rows = []
    for di in (-1, 0, 1):
        for dj in (-1, 0, 1):
            m = ((hh + di >= 0) & (hh + di < H) &
                 (ww + dj >= 0) & (ww + dj < W)).astype(jnp.float32)
            rows.append(m.reshape(1, S))
    mask = jnp.concatenate(rows, axis=0)                             # (9, S)

    def full_spec(shape):
        return pl.BlockSpec(shape, lambda n: (0,) * len(shape))

    kernel = functools.partial(_bottleneck_kernel, H=H, W=W)

    out = pl.pallas_call(
        kernel,
        out_shape=jax.ShapeDtypeStruct((N, Cin, S), jnp.float32),
        grid_spec=pltpu.PrefetchScalarGridSpec(
            num_scalar_prefetch=0,
            grid=(N,),
            in_specs=[
                pl.BlockSpec((None, Cin, S), lambda n: (n, 0, 0)),   # x (squeezed batch)
                full_spec((Pp, Cin)), full_spec((Pp, 1)),            # conv1 / bn1
                full_spec((Pp, 9 * Pp)), full_spec((Pp, 1)),         # conv2 / bn2
                full_spec((Cin, Pp)), full_spec((Cin, 1)),           # conv3 / bn3+scatter
                full_spec((9, S)),                                   # conv2 pad mask
            ],
            out_specs=pl.BlockSpec((None, Cin, S), lambda n: (n, 0, 0)),
        ),
        compiler_params=pltpu.CompilerParams(
            dimension_semantics=("parallel",)),   # N shards across TCs on v7x
    )(x, w1f, b1f, w2f, b2f, w3f, b3f, mask)

    return out.reshape(N, Cin, H, W)


def bottleneck_reference(x, params, index, eps=1e-5):
    """Pure-JAX NCHW reference mirroring the PyTorch forward (eval-mode BN)."""
    dn = ("NCHW", "OIHW", "NCHW")

    def bn(y, gamma, beta, mean, var):
        g = gamma[None, :, None, None]
        b = beta[None, :, None, None]
        m = mean[None, :, None, None]
        v = var[None, :, None, None]
        return (y - m) / jnp.sqrt(v + eps) * g + b

    out = lax.conv_general_dilated(x, params["w1"], (1, 1), "VALID",
                                   dimension_numbers=dn)
    out = jax.nn.relu(bn(out, *params["bn1"]))
    out = lax.conv_general_dilated(out, params["w2"], (1, 1),
                                   ((1, 1), (1, 1)), dimension_numbers=dn)
    out = jax.nn.relu(bn(out, *params["bn2"]))
    out = lax.conv_general_dilated(out, params["w3"], (1, 1), "VALID",
                                   dimension_numbers=dn)
    out = bn(out, *params["bn3"])
    residual = x.at[:, index, :, :].add(out)   # == residual.index_add_(1, index, out)
    return jax.nn.relu(residual)


def make_params(key, inplanes, planes, plane_expand):
    ks = jax.random.split(key, 16)

    def bn_params(k, c):
        k1, k2, k3, k4 = jax.random.split(k, 4)
        gamma = jax.random.uniform(k1, (c,), jnp.float32, 0.5, 1.5)
        beta = 0.1 * jax.random.normal(k2, (c,), jnp.float32)
        mean = 0.1 * jax.random.normal(k3, (c,), jnp.float32)
        var = jax.random.uniform(k4, (c,), jnp.float32, 0.5, 1.5)
        return (gamma, beta, mean, var)

    params = {
        "w1": 0.2 * jax.random.normal(ks[0], (planes, inplanes, 1, 1), jnp.float32),
        "w2": 0.2 * jax.random.normal(ks[1], (planes, planes, 3, 3), jnp.float32),
        "w3": 0.2 * jax.random.normal(ks[2], (plane_expand, planes, 1, 1), jnp.float32),
        "bn1": bn_params(ks[3], planes),
        "bn2": bn_params(ks[4], planes),
        "bn3": bn_params(ks[5], plane_expand),
    }
    return params


if __name__ == "__main__":
    key = jax.random.PRNGKey(0)
    k_x, k_p = jax.random.split(key)

    # Small, module-consistent shapes.
    N, inplanes, H, W = 2, 8, 16, 16
    planes, plane_expand = 4, 6
    # index: plane_expand channel indices into the residual (with a duplicate,
    # exercising index_add_ accumulation semantics).
    index = jnp.array([0, 2, 5, 7, 2, 3], dtype=jnp.int32)

    x = jax.random.normal(k_x, (N, inplanes, H, W), jnp.float32)
    params = make_params(k_p, inplanes, planes, plane_expand)

    run = jax.jit(functools.partial(bottleneck_pallas, params=params, index=index))
    out = jax.block_until_ready(run(x))

    ref = bottleneck_reference(x, params, index)
    assert out.shape == ref.shape == (N, inplanes, H, W)
    err = float(jnp.max(jnp.abs(out - ref)))
    assert jnp.allclose(out, ref, rtol=1e-4, atol=1e-4), err

    print("KERNEL_OK")
</pallas_src>

<mosaic_0001>
module attributes {stable_mosaic.version = 11 : i64} {
  func.func @_bottleneck_kernel(%arg0: i32, %arg1: memref<1x8x256xf32, #tpu.memory_space<vmem>>, %arg2: memref<8x8xf32, #tpu.memory_space<vmem>>, %arg3: memref<8x1xf32, #tpu.memory_space<vmem>>, %arg4: memref<8x72xf32, #tpu.memory_space<vmem>>, %arg5: memref<8x1xf32, #tpu.memory_space<vmem>>, %arg6: memref<8x8xf32, #tpu.memory_space<vmem>>, %arg7: memref<8x1xf32, #tpu.memory_space<vmem>>, %arg8: memref<9x256xf32, #tpu.memory_space<vmem>>, %arg9: memref<1x8x256xf32, #tpu.memory_space<vmem>>) attributes {dimension_semantics = [#tpu.dimension_semantics<parallel>], iteration_bounds = array<i64: 2>, scalar_prefetch = 0 : i64, scratch_operands = 0 : i64, tpu.core_type = #tpu.core_type<tc>, window_params = [{transform_indices = @transform_0, window_bounds = array<i64: 1, 8, 256>}, {pipeline_mode = #tpu.pipeline_mode<synchronous>, transform_indices = @transform_1, window_bounds = array<i64: 8, 8>}, {pipeline_mode = #tpu.pipeline_mode<synchronous>, transform_indices = @transform_2, window_bounds = array<i64: 8, 1>}, {pipeline_mode = #tpu.pipeline_mode<synchronous>, transform_indices = @transform_3, window_bounds = array<i64: 8, 72>}, {pipeline_mode = #tpu.pipeline_mode<synchronous>, transform_indices = @transform_4, window_bounds = array<i64: 8, 1>}, {pipeline_mode = #tpu.pipeline_mode<synchronous>, transform_indices = @transform_5, window_bounds = array<i64: 8, 8>}, {pipeline_mode = #tpu.pipeline_mode<synchronous>, transform_indices = @transform_6, window_bounds = array<i64: 8, 1>}, {pipeline_mode = #tpu.pipeline_mode<synchronous>, transform_indices = @transform_7, window_bounds = array<i64: 9, 256>}, {transform_indices = @transform_8, window_bounds = array<i64: 1, 8, 256>}]} {
    %c0 = arith.constant 0 : index
    %c0_0 = arith.constant 0 : index
    %c0_1 = arith.constant 0 : index
    %0 = vector.load %arg1[%c0, %c0_0, %c0_1] : memref<1x8x256xf32, #tpu.memory_space<vmem>>, vector<1x8x256xf32>
    %1 = vector.shape_cast %0 : vector<1x8x256xf32> to vector<8x256xf32>
    %c0_2 = arith.constant 0 : index
    %c0_3 = arith.constant 0 : index
    %2 = vector.load %arg2[%c0_2, %c0_3] : memref<8x8xf32, #tpu.memory_space<vmem>>, vector<8x8xf32>
    %cst = arith.constant dense<0.000000e+00> : vector<8x256xf32>
    %3 = tpu.matmul %2, %1, %cst {dimension_numbers = #tpu.dot_dimension_numbers<[1], [0], [0], [1], [0, 0, 1, 1], [], []>} : vector<8x8xf32>, vector<8x256xf32>, vector<8x256xf32> -> vector<8x256xf32>
    %c0_4 = arith.constant 0 : index
    %c0_5 = arith.constant 0 : index
    %4 = vector.load %arg3[%c0_4, %c0_5] : memref<8x1xf32, #tpu.memory_space<vmem>>, vector<8x1xf32>
    %5 = vector.broadcast %4 : vector<8x1xf32> to vector<8x256xf32>
    %6 = arith.addf %3, %5 : vector<8x256xf32>
    %cst_6 = arith.constant 0.000000e+00 : f32
    %7 = vector.broadcast %cst_6 : f32 to vector<8x256xf32>
    %8 = arith.maximumf %6, %7 : vector<8x256xf32>
    %c0_7 = arith.constant 0 : index
    %c0_8 = arith.constant 0 : index
    %9 = vector.load %arg8[%c0_7, %c0_8] : memref<9x256xf32, #tpu.memory_space<vmem>>, vector<9x256xf32>
    %c17_i32 = arith.constant 17 : i32
    %10 = tpu.dynamic_rotate %8 by %c17_i32 dim 1 : vector<8x256xf32>, i32 -> vector<8x256xf32>
    %11 = vector.extract_strided_slice %9 {offsets = [0, 0], sizes = [1, 256], strides = [1, 1]} : vector<9x256xf32> to vector<1x256xf32>
    %12 = vector.shape_cast %11 : vector<1x256xf32> to vector<256xf32>
    %13 = vector.shape_cast %12 : vector<256xf32> to vector<1x256xf32>
    %14 = vector.broadcast %13 : vector<1x256xf32> to vector<8x256xf32>
    %15 = arith.mulf %10, %14 : vector<8x256xf32>
    %c16_i32 = arith.constant 16 : i32
    %16 = tpu.dynamic_rotate %8 by %c16_i32 dim 1 : vector<8x256xf32>, i32 -> vector<8x256xf32>
    %17 = vector.extract_strided_slice %9 {offsets = [1, 0], sizes = [1, 256], strides = [1, 1]} : vector<9x256xf32> to vector<1x256xf32>
    %18 = vector.shape_cast %17 : vector<1x256xf32> to vector<256xf32>
    %19 = vector.shape_cast %18 : vector<256xf32> to vector<1x256xf32>
    %20 = vector.broadcast %19 : vector<1x256xf32> to vector<8x256xf32>
    %21 = arith.mulf %16, %20 : vector<8x256xf32>
    %c15_i32 = arith.constant 15 : i32
    %22 = tpu.dynamic_rotate %8 by %c15_i32 dim 1 : vector<8x256xf32>, i32 -> vector<8x256xf32>
    %23 = vector.extract_strided_slice %9 {offsets = [2, 0], sizes = [1, 256], strides = [1, 1]} : vector<9x256xf32> to vector<1x256xf32>
    %24 = vector.shape_cast %23 : vector<1x256xf32> to vector<256xf32>
    %25 = vector.shape_cast %24 : vector<256xf32> to vector<1x256xf32>
    %26 = vector.broadcast %25 : vector<1x256xf32> to vector<8x256xf32>
    %27 = arith.mulf %22, %26 : vector<8x256xf32>
    %c1_i32 = arith.constant 1 : i32
    %28 = tpu.dynamic_rotate %8 by %c1_i32 dim 1 : vector<8x256xf32>, i32 -> vector<8x256xf32>
    %29 = vector.extract_strided_slice %9 {offsets = [3, 0], sizes = [1, 256], strides = [1, 1]} : vector<9x256xf32> to vector<1x256xf32>
    %30 = vector.shape_cast %29 : vector<1x256xf32> to vector<256xf32>
    %31 = vector.shape_cast %30 : vector<256xf32> to vector<1x256xf32>
    %32 = vector.broadcast %31 : vector<1x256xf32> to vector<8x256xf32>
    %33 = arith.mulf %28, %32 : vector<8x256xf32>
    %c255_i32 = arith.constant 255 : i32
    %34 = tpu.dynamic_rotate %8 by %c255_i32 dim 1 : vector<8x256xf32>, i32 -> vector<8x256xf32>
    %35 = vector.extract_strided_slice %9 {offsets = [5, 0], sizes = [1, 256], strides = [1, 1]} : vector<9x256xf32> to vector<1x256xf32>
    %36 = vector.shape_cast %35 : vector<1x256xf32> to vector<256xf32>
    %37 = vector.shape_cast %36 : vector<256xf32> to vector<1x256xf32>
    %38 = vector.broadcast %37 : vector<1x256xf32> to vector<8x256xf32>
    %39 = arith.mulf %34, %38 : vector<8x256xf32>
    %c241_i32 = arith.constant 241 : i32
    %40 = tpu.dynamic_rotate %8 by %c241_i32 dim 1 : vector<8x256xf32>, i32 -> vector<8x256xf32>
    %41 = vector.extract_strided_slice %9 {offsets = [6, 0], sizes = [1, 256], strides = [1, 1]} : vector<9x256xf32> to vector<1x256xf32>
    %42 = vector.shape_cast %41 : vector<1x256xf32> to vector<256xf32>
    %43 = vector.shape_cast %42 : vector<256xf32> to vector<1x256xf32>
    %44 = vector.broadcast %43 : vector<1x256xf32> to vector<8x256xf32>
    %45 = arith.mulf %40, %44 : vector<8x256xf32>
    %c240_i32 = arith.constant 240 : i32
    %46 = tpu.dynamic_rotate %8 by %c240_i32 dim 1 : vector<8x256xf32>, i32 -> vector<8x256xf32>
    %47 = vector.extract_strided_slice %9 {offsets = [7, 0], sizes = [1, 256], strides = [1, 1]} : vector<9x256xf32> to vector<1x256xf32>
    %48 = vector.shape_cast %47 : vector<1x256xf32> to vector<256xf32>
    %49 = vector.shape_cast %48 : vector<256xf32> to vector<1x256xf32>
    %50 = vector.broadcast %49 : vector<1x256xf32> to vector<8x256xf32>
    %51 = arith.mulf %46, %50 : vector<8x256xf32>
    %c239_i32 = arith.constant 239 : i32
    %52 = tpu.dynamic_rotate %8 by %c239_i32 dim 1 : vector<8x256xf32>, i32 -> vector<8x256xf32>
    %53 = vector.extract_strided_slice %9 {offsets = [8, 0], sizes = [1, 256], strides = [1, 1]} : vector<9x256xf32> to vector<1x256xf32>
    %54 = vector.shape_cast %53 : vector<1x256xf32> to vector<256xf32>
    %55 = vector.shape_cast %54 : vector<256xf32> to vector<1x256xf32>
    %56 = vector.broadcast %55 : vector<1x256xf32> to vector<8x256xf32>
    %57 = arith.mulf %52, %56 : vector<8x256xf32>
    %58 = tpu.concatenate %15, %21, %27, %33, %8, %39, %45, %51, %57 in 0 : vector<8x256xf32>, vector<8x256xf32>, vector<8x256xf32>, vector<8x256xf32>, vector<8x256xf32>, vector<8x256xf32>, vector<8x256xf32>, vector<8x256xf32>, vector<8x256xf32> -> vector<72x256xf32>
    %c0_9 = arith.constant 0 : index
    %c0_10 = arith.constant 0 : index
    %59 = vector.load %arg4[%c0_9, %c0_10] : memref<8x72xf32, #tpu.memory_space<vmem>>, vector<8x72xf32>
    %cst_11 = arith.constant dense<0.000000e+00> : vector<8x256xf32>
    %60 = tpu.matmul %59, %58, %cst_11 {dimension_numbers = #tpu.dot_dimension_numbers<[1], [0], [0], [1], [0, 0, 1, 1], [], []>} : vector<8x72xf32>, vector<72x256xf32>, vector<8x256xf32> -> vector<8x256xf32>
    %c0_12 = arith.constant 0 : index
    %c0_13 = arith.constant 0 : index
    %61 = vector.load %arg5[%c0_12, %c0_13] : memref<8x1xf32, #tpu.memory_space<vmem>>, vector<8x1xf32>
    %62 = vector.broadcast %61 : vector<8x1xf32> to vector<8x256xf32>
    %63 = arith.addf %60, %62 : vector<8x256xf32>
    %cst_14 = arith.constant 0.000000e+00 : f32
    %64 = vector.broadcast %cst_14 : f32 to vector<8x256xf32>
    %65 = arith.maximumf %63, %64 : vector<8x256xf32>
    %c0_15 = arith.constant 0 : index
    %c0_16 = arith.constant 0 : index
    %66 = vector.load %arg6[%c0_15, %c0_16] : memref<8x8xf32, #tpu.memory_space<vmem>>, vector<8x8xf32>
    %cst_17 = arith.constant dense<0.000000e+00> : vector<8x256xf32>
    %67 = tpu.matmul %66, %65, %cst_17 {dimension_numbers = #tpu.dot_dimension_numbers<[1], [0], [0], [1], [0, 0, 1, 1], [], []>} : vector<8x8xf32>, vector<8x256xf32>, vector<8x256xf32> -> vector<8x256xf32>
    %68 = arith.addf %1, %67 : vector<8x256xf32>
    %c0_18 = arith.constant 0 : index
    %c0_19 = arith.constant 0 : index
    %69 = vector.load %arg7[%c0_18, %c0_19] : memref<8x1xf32, #tpu.memory_space<vmem>>, vector<8x1xf32>
    %70 = vector.broadcast %69 : vector<8x1xf32> to vector<8x256xf32>
    %71 = arith.addf %68, %70 : vector<8x256xf32>
    %cst_20 = arith.constant 0.000000e+00 : f32
    %72 = vector.broadcast %cst_20 : f32 to vector<8x256xf32>
    %73 = arith.maximumf %71, %72 : vector<8x256xf32>
    %c0_21 = arith.constant 0 : index
    %c0_22 = arith.constant 0 : index
    %c0_23 = arith.constant 0 : index
    %74 = vector.load %arg9[%c0_21, %c0_22, %c0_23] : memref<1x8x256xf32, #tpu.memory_space<vmem>>, vector<1x8x256xf32>
    %75 = vector.shape_cast %74 : vector<1x8x256xf32> to vector<8x256xf32>
    %76 = vector.shape_cast %73 : vector<8x256xf32> to vector<1x8x256xf32>
    tpu.vector_store %arg9[%c0_21, %c0_22, %c0_23], %76 {strides = array<i32>} : memref<1x8x256xf32, #tpu.memory_space<vmem>>, vector<1x8x256xf32>,
    return
  }
  func.func @transform_0(%arg0: i32) -> (i32, i32, i32) {
    %c0_i32 = arith.constant 0 : i32
    %c0_i32_0 = arith.constant 0 : i32
    %c0_i32_1 = arith.constant 0 : i32
    return %arg0, %c0_i32, %c0_i32_0 : i32, i32, i32
  }
  func.func @transform_1(%arg0: i32) -> (i32, i32) {
    %c0_i32 = arith.constant 0 : i32
    %c0_i32_0 = arith.constant 0 : i32
    %c0_i32_1 = arith.constant 0 : i32
    return %c0_i32, %c0_i32_0 : i32, i32
  }
  func.func @transform_2(%arg0: i32) -> (i32, i32) {
    %c0_i32 = arith.constant 0 : i32
    %c0_i32_0 = arith.constant 0 : i32
    %c0_i32_1 = arith.constant 0 : i32
    return %c0_i32, %c0_i32_0 : i32, i32
  }
  func.func @transform_3(%arg0: i32) -> (i32, i32) {
    %c0_i32 = arith.constant 0 : i32
    %c0_i32_0 = arith.constant 0 : i32
    %c0_i32_1 = arith.constant 0 : i32
    return %c0_i32, %c0_i32_0 : i32, i32
  }
  func.func @transform_4(%arg0: i32) -> (i32, i32) {
    %c0_i32 = arith.constant 0 : i32
    %c0_i32_0 = arith.constant 0 : i32
    %c0_i32_1 = arith.constant 0 : i32
    return %c0_i32, %c0_i32_0 : i32, i32
  }
  func.func @transform_5(%arg0: i32) -> (i32, i32) {
    %c0_i32 = arith.constant 0 : i32
    %c0_i32_0 = arith.constant 0 : i32
    %c0_i32_1 = arith.constant 0 : i32
    return %c0_i32, %c0_i32_0 : i32, i32
  }
  func.func @transform_6(%arg0: i32) -> (i32, i32) {
    %c0_i32 = arith.constant 0 : i32
    %c0_i32_0 = arith.constant 0 : i32
    %c0_i32_1 = arith.constant 0 : i32
    return %c0_i32, %c0_i32_0 : i32, i32
  }
  func.func @transform_7(%arg0: i32) -> (i32, i32) {
    %c0_i32 = arith.constant 0 : i32
    %c0_i32_0 = arith.constant 0 : i32
    %c0_i32_1 = arith.constant 0 : i32
    return %c0_i32, %c0_i32_0 : i32, i32
  }
  func.func @transform_8(%arg0: i32) -> (i32, i32, i32) {
    %c0_i32 = arith.constant 0 : i32
    %c0_i32_0 = arith.constant 0 : i32
    %c0_i32_1 = arith.constant 0 : i32
    return %arg0, %c0_i32, %c0_i32_0 : i32, i32, i32
  }
}

</mosaic_0001>

<llo_original>
// kernel: bottleneck_pallas.1
$region0: #{bottleneck_pallas.1}
  #allocation0 [shape = 'u32[]', space=smem, size = 0x4, offset = 0x4, fixed_abs, tag = 'smem constant byte address 0x4 - core index']
  #allocation1 [shape = 'u32[72,128]{1,0:T(1,128)}', space=vmem, size = 0x9000, scoped, tag = 'internal scratch']
  %s0 = inlined_call_operand.vmem [shape: f32[2,8,256], index: 0, kind: input, shape index: {}]
  %s1 = inlined_call_operand.vmem [shape: f32[8,8], index: 1, kind: input, shape index: {}]
  %s2 = inlined_call_operand.vmem [shape: f32[8,1], index: 2, kind: input, shape index: {}]
  %s3 = inlined_call_operand.vmem [shape: f32[8,72], index: 3, kind: input, shape index: {}]
  %s4 = inlined_call_operand.vmem [shape: f32[8,1], index: 4, kind: input, shape index: {}]
  %s5 = inlined_call_operand.vmem [shape: f32[8,8], index: 5, kind: input, shape index: {}]
  %s6 = inlined_call_operand.vmem [shape: f32[8,1], index: 6, kind: input, shape index: {}]
  %s7 = inlined_call_operand.vmem [shape: f32[9,256], index: 7, kind: input, shape index: {}]
  %s8 = inlined_call_operand.vmem [shape: f32[2,8,256], index: 8, kind: output, shape index: {}]
  %s9 = sld [smem:[#allocation0]]
  $region65: #{bottleneck_pallas.1} parent=0
    _
  %s11 = ssub.s32 1, %s9
  %s12 = scalar_select 0, %s11, %s9
  loop: start=0, step=1, limit=4
  $region2: #{bottleneck_pallas.1} parent=0 // loop_pre_header
    _
  $region3: #{bottleneck_pallas.1} parent=0 // loop_header
    %s14 = sphi 0, %s18
    %p15 = scmp.ge.s32.totalorder %s14, 4
    %s24 = sphi 0, %s26
    %s27 = sphi 0, %s24
    %s28 = sphi 0, %s27
    %s44 = sphi 0, %s28
    %s48 = sphi 0, %s48
    %s50 = sphi 0, %s48
    %s51 = sphi 0, %s50
    %s65 = sphi 0, %s51
    %s69 = sphi 0, %s69
    %s71 = sphi 0, %s69
    %s72 = sphi 0, %s71
    %s86 = sphi 0, %s72
    %s90 = sphi 0, %s90
    %s92 = sphi 0, %s90
    %s93 = sphi 0, %s92
    %s107 = sphi 0, %s93
    %s111 = sphi 0, %s111
    %s113 = sphi 0, %s111
    %s114 = sphi 0, %s113
    %s128 = sphi 0, %s114
    %s132 = sphi 0, %s132
    %s134 = sphi 0, %s132
    %s135 = sphi 0, %s134
    %s149 = sphi 0, %s135
    %s153 = sphi 0, %s153
    %s155 = sphi 0, %s153
    %s156 = sphi 0, %s155
    %s170 = sphi 0, %s156
    %s174 = sphi 0, %s174
    %s176 = sphi 0, %s174
    %s177 = sphi 0, %s176
    %s191 = sphi 0, %s177
    %s197 = sphi 0, %s199
    %s200 = sphi 0, %s197
    %s201 = sphi 0, %s200
    %s217 = sphi 0, %s201
  $region4: #{bottleneck_pallas.1} parent=0 // loop_header_branch
    %17 = sbr.rel (%p15) target = $region8
  $region5: #{bottleneck_pallas.1} parent=0 // loop_body
    %s19 = ssub.s32 %s14, 1
    %s20 = ssub.s32 %s14, 2
    %s21 = sadd.s32 %s14, 1
    %s22 = ssub.s32 %s14, %s21
    %p23 = scmp.eq.s32.totalorder %s22, 0
    %s25 = sadd.s32 %s24, 1
    %s26 = scalar_select %p23, %s24, %s25
    %p29 = pneg %p23
    %p30 = scmp.eq.s32.totalorder %s14, 1
    %p31 = por %p29, %p30
    %p32 = scmp.ne.s32.totalorder %s24, %s27
    %p33 = scmp.eq.s32.totalorder %s14, 0
    %p34 = por %p32, %p33
    %p35 = scmp.ne.s32.totalorder %s24, %s27
    %p36 = scmp.eq.s32.totalorder %s19, 1
    %p37 = por %p35, %p36
    %p38 = scmp.ne.s32.totalorder %s27, %s28
    %p39 = scmp.eq.s32.totalorder %s19, 0
    %p40 = por %p38, %p39
    %p41 = scmp.ne.s32.totalorder %s27, %s28
    %p42 = scmp.eq.s32.totalorder %s20, 1
    %p43 = por %p41, %p42
    %p45 = scmp.ne.s32.totalorder %s28, %s44
    %p46 = scmp.eq.s32.totalorder %s20, 0
    %p47 = por %p45, %p46
    %s49 = sadd.s32 %s48, 1
    %p52 = scmp.eq.s32.totalorder %s14, 1
    %p53 = scmp.ne.s32.totalorder %s48, %s50
    %p54 = scmp.eq.s32.totalorder %s14, 0
    %p55 = por %p53, %p54
    %p56 = scmp.ne.s32.totalorder %s48, %s50
    %p57 = scmp.eq.s32.totalorder %s19, 1
    %p58 = por %p56, %p57
    %p59 = scmp.ne.s32.totalorder %s50, %s51
    %p60 = scmp.eq.s32.totalorder %s19, 0
    %p61 = por %p59, %p60
    %p62 = scmp.ne.s32.totalorder %s50, %s51
    %p63 = scmp.eq.s32.totalorder %s20, 1
    %p64 = por %p62, %p63
    %p66 = scmp.ne.s32.totalorder %s51, %s65
    %p67 = scmp.eq.s32.totalorder %s20, 0
    %p68 = por %p66, %p67
    %s70 = sadd.s32 %s69, 1
    %p73 = scmp.eq.s32.totalorder %s14, 1
    %p74 = scmp.ne.s32.totalorder %s69, %s71
    %p75 = scmp.eq.s32.totalorder %s14, 0
    %p76 = por %p74, %p75
    %p77 = scmp.ne.s32.totalorder %s69, %s71
    %p78 = scmp.eq.s32.totalorder %s19, 1
    %p79 = por %p77, %p78
    %p80 = scmp.ne.s32.totalorder %s71, %s72
    %p81 = scmp.eq.s32.totalorder %s19, 0
    %p82 = por %p80, %p81
    %p83 = scmp.ne.s32.totalorder %s71, %s72
    %p84 = scmp.eq.s32.totalorder %s20, 1
    %p85 = por %p83, %p84
    %p87 = scmp.ne.s32.totalorder %s72, %s86
    %p88 = scmp.eq.s32.totalorder %s20, 0
    %p89 = por %p87, %p88
    %s91 = sadd.s32 %s90, 1
    %p94 = scmp.eq.s32.totalorder %s14, 1
    %p95 = scmp.ne.s32.totalorder %s90, %s92
    %p96 = scmp.eq.s32.totalorder %s14, 0
    %p97 = por %p95, %p96
    %p98 = scmp.ne.s32.totalorder %s90, %s92
    %p99 = scmp.eq.s32.totalorder %s19, 1
    %p100 = por %p98, %p99
    %p101 = scmp.ne.s32.totalorder %s92, %s93
    %p102 = scmp.eq.s32.totalorder %s19, 0
    %p103 = por %p101, %p102
    %p104 = scmp.ne.s32.totalorder %s92, %s93
    %p105 = scmp.eq.s32.totalorder %s20, 1
    %p106 = por %p104, %p105
    %p108 = scmp.ne.s32.totalorder %s93, %s107
    %p109 = scmp.eq.s32.totalorder %s20, 0
    %p110 = por %p108, %p109
    %s112 = sadd.s32 %s111, 1
    %p115 = scmp.eq.s32.totalorder %s14, 1
    %p116 = scmp.ne.s32.totalorder %s111, %s113
    %p117 = scmp.eq.s32.totalorder %s14, 0
    %p118 = por %p116, %p117
    %p119 = scmp.ne.s32.totalorder %s111, %s113
    %p120 = scmp.eq.s32.totalorder %s19, 1
    %p121 = por %p119, %p120
    %p122 = scmp.ne.s32.totalorder %s113, %s114
    %p123 = scmp.eq.s32.totalorder %s19, 0
    %p124 = por %p122, %p123
    %p125 = scmp.ne.s32.totalorder %s113, %s114
    %p126 = scmp.eq.s32.totalorder %s20, 1
    %p127 = por %p125, %p126
    %p129 = scmp.ne.s32.totalorder %s114, %s128
    %p130 = scmp.eq.s32.totalorder %s20, 0
    %p131 = por %p129, %p130
    %s133 = sadd.s32 %s132, 1
    %p136 = scmp.eq.s32.totalorder %s14, 1
    %p137 = scmp.ne.s32.totalorder %s132, %s134
    %p138 = scmp.eq.s32.totalorder %s14, 0
    %p139 = por %p137, %p138
    %p140 = scmp.ne.s32.totalorder %s132, %s134
    %p141 = scmp.eq.s32.totalorder %s19, 1
    %p142 = por %p140, %p141
    %p143 = scmp.ne.s32.totalorder %s134, %s135
    %p144 = scmp.eq.s32.totalorder %s19, 0
    %p145 = por %p143, %p144
    %p146 = scmp.ne.s32.totalorder %s134, %s135
    %p147 = scmp.eq.s32.totalorder %s20, 1
    %p148 = por %p146, %p147
    %p150 = scmp.ne.s32.totalorder %s135, %s149
    %p151 = scmp.eq.s32.totalorder %s20, 0
    %p152 = por %p150, %p151
    %s154 = sadd.s32 %s153, 1
    %p157 = scmp.eq.s32.totalorder %s14, 1
    %p158 = scmp.ne.s32.totalorder %s153, %s155
    %p159 = scmp.eq.s32.totalorder %s14, 0
    %p160 = por %p158, %p159
    %p161 = scmp.ne.s32.totalorder %s153, %s155
    %p162 = scmp.eq.s32.totalorder %s19, 1
    %p163 = por %p161, %p162
    %p164 = scmp.ne.s32.totalorder %s155, %s156
    %p165 = scmp.eq.s32.totalorder %s19, 0
    %p166 = por %p164, %p165
    %p167 = scmp.ne.s32.totalorder %s155, %s156
    %p168 = scmp.eq.s32.totalorder %s20, 1
    %p169 = por %p167, %p168
    %p171 = scmp.ne.s32.totalorder %s156, %s170
    %p172 = scmp.eq.s32.totalorder %s20, 0
    %p173 = por %p171, %p172
    %s175 = sadd.s32 %s174, 1
    %p178 = scmp.eq.s32.totalorder %s14, 1
    %p179 = scmp.ne.s32.totalorder %s174, %s176
    %p180 = scmp.eq.s32.totalorder %s14, 0
    %p181 = por %p179, %p180
    %p182 = scmp.ne.s32.totalorder %s174, %s176
    %p183 = scmp.eq.s32.totalorder %s19, 1
    %p184 = por %p182, %p183
    %p185 = scmp.ne.s32.totalorder %s176, %s177
    %p186 = scmp.eq.s32.totalorder %s19, 0
    %p187 = por %p185, %p186
    %p188 = scmp.ne.s32.totalorder %s176, %s177
    %p189 = scmp.eq.s32.totalorder %s20, 1
    %p190 = por %p188, %p189
    %p192 = scmp.ne.s32.totalorder %s177, %s191
    %p193 = scmp.eq.s32.totalorder %s20, 0
    %p194 = por %p192, %p193
    %s195 = ssub.s32 %s14, %s21
    %p196 = scmp.eq.s32.totalorder %s195, 0
    %s198 = sadd.s32 %s197, 1
    %s199 = scalar_select %p196, %s197, %s198
    %p202 = pneg %p196
    %p203 = scmp.eq.s32.totalorder %s14, 1
    %p204 = por %p202, %p203
    %p205 = scmp.ne.s32.totalorder %s197, %s200
    %p206 = scmp.eq.s32.totalorder %s14, 0
    %p207 = por %p205, %p206
    %p208 = scmp.ne.s32.totalorder %s197, %s200
    %p209 = scmp.eq.s32.totalorder %s19, 1
    %p210 = por %p208, %p209
    %p211 = scmp.ne.s32.totalorder %s200, %s201
    %p212 = scmp.eq.s32.totalorder %s19, 0
    %p213 = por %p211, %p212
    %p214 = scmp.ne.s32.totalorder %s200, %s201
    %p215 = scmp.eq.s32.totalorder %s20, 1
    %p216 = por %p214, %p215
    %p218 = scmp.ne.s32.totalorder %s201, %s217
    %p219 = scmp.eq.s32.totalorder %s20, 0
    %p220 = por %p218, %p219
    %p221 = scmp.le.s32.totalorder 1, %s14
    %p222 = scmp.lt.s32.totalorder %s14, 3
    %p223 = pnand %p221, %p222
    %p224 = pneg %p223
    // Predicated region
    $region9: #{bottleneck_pallas.1} parent=5 // pred_check
      _
    $region10: #{bottleneck_pallas.1} parent=5 // pred_check_branch
      %226 = sbr.rel (%p223) target = $region12
    $region11: #{bottleneck_pallas.1} parent=5 // pred_region
      %s227 = ssub.s32 %s14, 1
      // Predicated region
      $region13: #{bottleneck_pallas.1} parent=11 // pred_check
        %p228 = pneg %p61
      $region14: #{bottleneck_pallas.1} parent=11 // pred_check_branch
        %230 = sbr.rel (%p228) target = $region16
      $region15: #{bottleneck_pallas.1} parent=11 // pred_region
        _
      $region16: #{bottleneck_pallas.1} parent=11 // pred_fallthru
        _
      // Predicated region
      $region17: #{bottleneck_pallas.1} parent=11 // pred_check
        %p231 = pneg %p82
      $region18: #{bottleneck_pallas.1} parent=11 // pred_check_branch
        %233 = sbr.rel (%p231) target = $region20
      $region19: #{bottleneck_pallas.1} parent=11 // pred_region
        _
      $region20: #{bottleneck_pallas.1} parent=11 // pred_fallthru
        _
      // Predicated region
      $region21: #{bottleneck_pallas.1} parent=11 // pred_check
        %p234 = pneg %p103
      $region22: #{bottleneck_pallas.1} parent=11 // pred_check_branch
        %236 = sbr.rel (%p234) target = $region24
      $region23: #{bottleneck_pallas.1} parent=11 // pred_region
        _
      $region24: #{bottleneck_pallas.1} parent=11 // pred_fallthru
        _
      // Predicated region
      $region25: #{bottleneck_pallas.1} parent=11 // pred_check
        %p237 = pneg %p124
      $region26: #{bottleneck_pallas.1} parent=11 // pred_check_branch
        %239 = sbr.rel (%p237) target = $region28
      $region27: #{bottleneck_pallas.1} parent=11 // pred_region
        _
      $region28: #{bottleneck_pallas.1} parent=11 // pred_fallthru
        _
      // Predicated region
      $region29: #{bottleneck_pallas.1} parent=11 // pred_check
        %p240 = pneg %p145
      $region30: #{bottleneck_pallas.1} parent=11 // pred_check_branch
        %242 = sbr.rel (%p240) target = $region32
      $region31: #{bottleneck_pallas.1} parent=11 // pred_region
        _
      $region32: #{bottleneck_pallas.1} parent=11 // pred_fallthru
        _
      // Predicated region
      $region33: #{bottleneck_pallas.1} parent=11 // pred_check
        %p243 = pneg %p166
      $region34: #{bottleneck_pallas.1} parent=11 // pred_check_branch
        %245 = sbr.rel (%p243) target = $region36
      $region35: #{bottleneck_pallas.1} parent=11 // pred_region
        _
      $region36: #{bottleneck_pallas.1} parent=11 // pred_fallthru
        _
      // Predicated region
      $region37: #{bottleneck_pallas.1} parent=11 // pred_check
        %p246 = pneg %p187
      $region38: #{bottleneck_pallas.1} parent=11 // pred_check_branch
        %248 = sbr.rel (%p246) target = $region40
      $region39: #{bottleneck_pallas.1} parent=11 // pred_region
        _
      $region40: #{bottleneck_pallas.1} parent=11 // pred_fallthru
        _
    $region12: #{bottleneck_pallas.1} parent=5 // pred_fallthru
      _
    %p249 = scmp.lt.s32.totalorder %s14, 2
    // Predicated region
    $region41: #{bottleneck_pallas.1} parent=5 // pred_check
      %p250 = pneg %p249
    $region42: #{bottleneck_pallas.1} parent=5 // pred_check_branch
      %252 = sbr.rel (%p250) target = $region44
    $region43: #{bottleneck_pallas.1} parent=5 // pred_region
      // Predicated region
      $region45: #{bottleneck_pallas.1} parent=43 // pred_check
        %p253 = pneg %p34
      $region46: #{bottleneck_pallas.1} parent=43 // pred_check_branch
        %255 = sbr.rel (%p253) target = $region48
      $region47: #{bottleneck_pallas.1} parent=43 // pred_region
        %p256 = scmp.lt.s32.totalorder %s14, 1
        %s257 = scalar_select %p256, %s14, 1
        %s258 = smul.addr %s257, 2
        %s259 = smul.addr %s258, 8
        %s260 = scalar_lea.vmem %s0, %s259
      $region48: #{bottleneck_pallas.1} parent=43 // pred_fallthru
        _
    $region44: #{bottleneck_pallas.1} parent=5 // pred_fallthru
      _
    %p261 = scmp.le.s32.totalorder 1, %s14
    %p262 = scmp.lt.s32.totalorder %s14, 3
    %p263 = pnand %p261, %p262
    %p264 = pneg %p263
    // Predicated region
    $region49: #{bottleneck_pallas.1} parent=5 // pred_check
      _
    $region50: #{bottleneck_pallas.1} parent=5 // pred_check_branch
      %266 = sbr.rel (%p263) target = $region52
    $region51: #{bottleneck_pallas.1} parent=5 // pred_region
      %s267 = ssub.s32 %s14, 1
      %p268 = scmp.lt.s32.totalorder %s19, 1
      %s269 = scalar_select %p268, %s19, 1
      %s270 = smul.addr %s269, 2
      %s271 = smul.addr %s270, 8
      %s272 = scalar_lea.vmem %s0, %s271
      %p273 = pneg %p40
      %p274 = pneg %p37
      %p275 = pneg %p61
      %p276 = pneg %p58
      %p277 = pneg %p82
      %p278 = pneg %p79
      %p279 = pneg %p103
      %p280 = pneg %p100
      %p281 = pneg %p124
      %p282 = pneg %p121
      %p283 = pneg %p145
      %p284 = pneg %p142
      %p285 = pneg %p166
      %p286 = pneg %p163
      %p287 = pneg %p187
      %p288 = pneg %p184
      %p289 = pneg %p213
      %p290 = pneg %p210
      %p291 = scmp.lt.s32.totalorder %s19, 1
      %s292 = scalar_select %p291, %s19, 1
      %s293 = smul.addr %s292, 2
      %s294 = smul.addr %s293, 8
      %s295 = scalar_lea.vmem %s8, %s294
      %p296 = scmp.lt.s32.totalorder %s19, 1
      %s297 = scalar_select %p296, %s19, 1
      %s298 = smul.addr %s297, 2
      %s299 = smul.addr %s298, 8
      %s300 = scalar_lea.vmem %s0, %s299
      %p301 = scmp.lt.s32.totalorder %s19, 1
      %s302 = scalar_select %p301, %s19, 1
      %s303 = smul.addr %s302, 2
      %s304 = smul.addr %s303, 8
      %s305 = scalar_lea.vmem %s8, %s304
      %v306 = vld [vmem:[%s300] sm:$0xff]
      %v307 = vld [vmem:[%s300 + $0x8] sm:$0xff]
      %v308 = vld [vmem:[%s1] sm:$0xff]
      %v309 = vld [vmem:[%s2] sm:$0xff]
      %311 = vset.pattern.permute.xlu0 0
      %312 = vperm.xlu0 %311, %v309
      %v313 = vpop.permute.xlu0 %312
      %vm315 = vcmask 64512
      %v317 = vsel %vm315, %v308, 0
      %319 = vmatpush.msra.mxu0 0.0
      %320 = vmatpush.msra.mxu0 0.0
      %321 = vmatpush.msra.mxu0 0.0
      %322 = vmatpush.msra.mxu0 0.0
      %323 = vmatpush.msra.mxu0 0.0
      %324 = vmatpush.msra.mxu0 0.0
      %325 = vmatpush.msra.mxu0 0.0
      %326 = vmatpush.msra.mxu0 0.0
      %327 = vmatpush.msra.mxu0 0.0
      %328 = vmatpush.msra.mxu0 0.0
      %329 = vmatpush.msra.mxu0 0.0
      %330 = vmatpush.msra.mxu0 0.0
      %331 = vmatpush.msra.mxu0 0.0
      %332 = vmatpush.msra.mxu0 0.0
      %333 = vmatpush.msra.mxu0 0.0
      %334 = vmatpush.msra.mxu0 %v306
      %335 = vmatmul.f32.gmra.mxu0 %v317
      %v336 = vpop.f32.mrf.mxu0
      %v337 = vadd.f32 %v313, %v336
      %338 = vdwg.mxu0
      %339 = vmatpush.msra.mxu0 0.0
      %340 = vmatpush.msra.mxu0 0.0
      %341 = vmatpush.msra.mxu0 0.0
      %342 = vmatpush.msra.mxu0 0.0
      %343 = vmatpush.msra.mxu0 0.0
      %344 = vmatpush.msra.mxu0 0.0
      %345 = vmatpush.msra.mxu0 0.0
      %346 = vmatpush.msra.mxu0 0.0
      %347 = vmatpush.msra.mxu0 0.0
      %348 = vmatpush.msra.mxu0 0.0
      %349 = vmatpush.msra.mxu0 0.0
      %350 = vmatpush.msra.mxu0 0.0
      %351 = vmatpush.msra.mxu0 0.0
      %352 = vmatpush.msra.mxu0 0.0
      %353 = vmatpush.msra.mxu0 0.0
      %354 = vmatpush.msra.mxu0 %v307
      %355 = vmatmul.f32.gmra.mxu0 %v317
      %v356 = vpop.f32.mrf.mxu0
      %v357 = vadd.f32 %v313, %v356
      %358 = vdwg.mxu0
      %v359 = vmax.f32 %v337, 0.0
      %v360 = vmax.f32 %v357, 0.0
      %v361 = vld [vmem:[%s7] sm:$0xff]
      %v362 = vld [vmem:[%s7 + $0x8] sm:$0xff]
      %v363 = vld [vmem:[%s7 + $0x10] sm:$0x1]
      %v364 = vld [vmem:[%s7 + $0x18] sm:$0x1]
      %365 = vrot.lane.b32.xlu0 %v359, 17
      %v366 = vpop.permute.xlu0 %365
      %367 = vrot.lane.b32.xlu0 %v360, 17
      %v368 = vpop.permute.xlu0 %367
      %v369 = vlaneseq
      %v370 = vand.u32 %v369, 127
      %vm371 = vcmp.lt.s32.totalorder %v370, 17
      %v372 = vsel %vm371, %v366, %v368
      %v373 = vsel %vm371, %v368, %v366
      %v374 = vperm.slane %v361, 0
      %v375 = vperm.slane %v362, 0
      %v376 = vmul.f32 %v373, %v374
      %v377 = vmul.f32 %v372, %v375
      %378 = vrot.lane.b32.xlu0 %v359, 16
      %v379 = vpop.permute.xlu0 %378
      %380 = vrot.lane.b32.xlu0 %v360, 16
      %v381 = vpop.permute.xlu0 %380
      %vm382 = vcmp.lt.s32.totalorder %v370, 16
      %v383 = vsel %vm382, %v379, %v381
      %v384 = vsel %vm382, %v381, %v379
      %v385 = vperm.slane %v361, 1
      %v386 = vperm.slane %v362, 1
      %v387 = vmul.f32 %v384, %v385
      %v388 = vmul.f32 %v383, %v386
      %389 = vrot.lane.b32.xlu0 %v359, 15
      %v390 = vpop.permute.xlu0 %389
      %391 = vrot.lane.b32.xlu0 %v360, 15
      %v392 = vpop.permute.xlu0 %391
      %vm393 = vcmp.lt.s32.totalorder %v370, 15
      %v394 = vsel %vm393, %v390, %v392
      %v395 = vsel %vm393, %v392, %v390
      %v396 = vperm.slane %v361, 2
      %v397 = vperm.slane %v362, 2
      %v398 = vmul.f32 %v395, %v396
      %v399 = vmul.f32 %v394, %v397
      %400 = vrot.lane.b32.xlu0 %v359, 1
      %v401 = vpop.permute.xlu0 %400
      %402 = vrot.lane.b32.xlu0 %v360, 1
      %v403 = vpop.permute.xlu0 %402
      %vm404 = vcmp.lt.s32.totalorder %v370, 1
      %v405 = vsel %vm404, %v401, %v403
      %v406 = vsel %vm404, %v403, %v401
      %v407 = vperm.slane %v361, 3
      %v408 = vperm.slane %v362, 3
      %v409 = vmul.f32 %v406, %v407
      %v410 = vmul.f32 %v405, %v408
      %411 = vrot.lane.b32.xlu0 %v359, 127
      %v412 = vpop.permute.xlu0 %411
      %413 = vrot.lane.b32.xlu0 %v360, 127
      %v414 = vpop.permute.xlu0 %413
      %vm415 = vcmp.lt.s32.totalorder %v370, 127
      %v416 = vsel %vm415, %v412, %v414
      %v417 = vsel %vm415, %v414, %v412
      %v418 = vperm.slane %v361, 5
      %v419 = vperm.slane %v362, 5
      %v420 = vmul.f32 %v416, %v418
      %v421 = vmul.f32 %v417, %v419
      %422 = vrot.lane.b32.xlu0 %v359, 113
      %v423 = vpop.permute.xlu0 %422
      %424 = vrot.lane.b32.xlu0 %v360, 113
      %v425 = vpop.permute.xlu0 %424
      %vm426 = vcmp.lt.s32.totalorder %v370, 113
      %v427 = vsel %vm426, %v423, %v425
      %v428 = vsel %vm426, %v425, %v423
      %v429 = vperm.slane %v361, 6
      %v430 = vperm.slane %v362, 6
      %v431 = vmul.f32 %v427, %v429
      %v432 = vmul.f32 %v428, %v430
      %433 = vrot.lane.b32.xlu0 %v359, 112
      %v434 = vpop.permute.xlu0 %433
      %435 = vrot.lane.b32.xlu0 %v360, 112
      %v436 = vpop.permute.xlu0 %435
      %vm437 = vcmp.lt.s32.totalorder %v370, 112
      %v438 = vsel %vm437, %v434, %v436
      %v439 = vsel %vm437, %v436, %v434
      %v440 = vperm.slane %v361, 7
      %v441 = vperm.slane %v362, 7
      %v442 = vmul.f32 %v438, %v440
      %v443 = vmul.f32 %v439, %v441
      %444 = vrot.lane.b32.xlu0 %v359, 111
      %v445 = vpop.permute.xlu0 %444
      %446 = vrot.lane.b32.xlu0 %v360, 111
      %v447 = vpop.permute.xlu0 %446
      %vm448 = vcmp.lt.s32.totalorder %v370, 111
      %v449 = vsel %vm448, %v445, %v447
      %v450 = vsel %vm448, %v447, %v445
      %v451 = vperm.slane %v363, 0
      %v452 = vperm.slane %v364, 0
      %v453 = vmul.f32 %v449, %v451
      %v454 = vmul.f32 %v450, %v452
      %v455 = vld [vmem:[%s3] sm:$0xff]
      %v456 = vld [vmem:[%s4] sm:$0xff]
      %458 = vset.pattern.permute.xlu0 0
      %459 = vperm.xlu0 %458, %v456
      %v460 = vpop.permute.xlu0 %459
      %vm462 = vcmask 588800
      %v464 = vsel %vm462, %v455, 0
      %466 = vmatpush.msra.mxu0 0.0
      %467 = vmatpush.msra.mxu0 0.0
      %468 = vmatpush.msra.mxu0 0.0
      %469 = vmatpush.msra.mxu0 0.0
      %470 = vmatpush.msra.mxu0 0.0
      %471 = vmatpush.msra.mxu0 0.0
      %472 = vmatpush.msra.mxu0 0.0
      %473 = vmatpush.msra.mxu0 %v453
      %474 = vmatpush.msra.mxu0 %v442
      %475 = vmatpush.msra.mxu0 %v431
      %476 = vmatpush.msra.mxu0 %v420
      %477 = vmatpush.msra.mxu0 %v359
      %478 = vmatpush.msra.mxu0 %v409
      %479 = vmatpush.msra.mxu0 %v398
      %480 = vmatpush.msra.mxu0 %v387
      %481 = vmatpush.msra.mxu0 %v376
      %482 = vmatmul.f32.gmra.mxu0 %v464
      %v483 = vpop.f32.mrf.mxu0
      %v484 = vadd.f32 %v460, %v483
      %485 = vdwg.mxu0
      %486 = vmatpush.msra.mxu0 0.0
      %487 = vmatpush.msra.mxu0 0.0
      %488 = vmatpush.msra.mxu0 0.0
      %489 = vmatpush.msra.mxu0 0.0
      %490 = vmatpush.msra.mxu0 0.0
      %491 = vmatpush.msra.mxu0 0.0
      %492 = vmatpush.msra.mxu0 0.0
      %493 = vmatpush.msra.mxu0 %v454
      %494 = vmatpush.msra.mxu0 %v443
      %495 = vmatpush.msra.mxu0 %v432
      %496 = vmatpush.msra.mxu0 %v421
      %497 = vmatpush.msra.mxu0 %v360
      %498 = vmatpush.msra.mxu0 %v410
      %499 = vmatpush.msra.mxu0 %v399
      %500 = vmatpush.msra.mxu0 %v388
      %501 = vmatpush.msra.mxu0 %v377
      %502 = vmatmul.f32.gmra.mxu0 %v464
      %v503 = vpop.f32.mrf.mxu0
      %v504 = vadd.f32 %v460, %v503
      %505 = vdwg.mxu0
      %v506 = vmax.f32 %v484, 0.0
      %v507 = vmax.f32 %v504, 0.0
      %v508 = vld [vmem:[%s5] sm:$0xff]
      %v510 = vsel %vm315, %v508, 0
      %512 = vmatpush.msra.mxu0 0.0
      %513 = vmatpush.msra.mxu0 0.0
      %514 = vmatpush.msra.mxu0 0.0
      %515 = vmatpush.msra.mxu0 0.0
      %516 = vmatpush.msra.mxu0 0.0
      %517 = vmatpush.msra.mxu0 0.0
      %518 = vmatpush.msra.mxu0 0.0
      %519 = vmatpush.msra.mxu0 0.0
      %520 = vmatpush.msra.mxu0 0.0
      %521 = vmatpush.msra.mxu0 0.0
      %522 = vmatpush.msra.mxu0 0.0
      %523 = vmatpush.msra.mxu0 0.0
      %524 = vmatpush.msra.mxu0 0.0
      %525 = vmatpush.msra.mxu0 0.0
      %526 = vmatpush.msra.mxu0 0.0
      %527 = vmatpush.msra.mxu0 %v506
      %528 = vmatmul.f32.gmra.mxu0 %v510
      %v529 = vpop.f32.mrf.mxu0
      %v530 = vadd.f32 0.0, %v529
      %531 = vdwg.mxu0
      %532 = vmatpush.msra.mxu0 0.0
      %533 = vmatpush.msra.mxu0 0.0
      %534 = vmatpush.msra.mxu0 0.0
      %535 = vmatpush.msra.mxu0 0.0
      %536 = vmatpush.msra.mxu0 0.0
      %537 = vmatpush.msra.mxu0 0.0
      %538 = vmatpush.msra.mxu0 0.0
      %539 = vmatpush.msra.mxu0 0.0
      %540 = vmatpush.msra.mxu0 0.0
      %541 = vmatpush.msra.mxu0 0.0
      %542 = vmatpush.msra.mxu0 0.0
      %543 = vmatpush.msra.mxu0 0.0
      %544 = vmatpush.msra.mxu0 0.0
      %545 = vmatpush.msra.mxu0 0.0
      %546 = vmatpush.msra.mxu0 0.0
      %547 = vmatpush.msra.mxu0 %v507
      %548 = vmatmul.f32.gmra.mxu0 %v510
      %v549 = vpop.f32.mrf.mxu0
      %v550 = vadd.f32 0.0, %v549
      %551 = vdwg.mxu0
      %v552 = vadd.f32 %v306, %v530
      %v553 = vadd.f32 %v307, %v550
      %v554 = vld [vmem:[%s6] sm:$0xff]
      %556 = vset.pattern.permute.xlu0 0
      %557 = vperm.xlu0 %556, %v554
      %v558 = vpop.permute.xlu0 %557
      %v560 = vadd.f32 %v552, %v558
      %v561 = vadd.f32 %v553, %v558
      %v562 = vmax.f32 %v560, 0.0
      %v563 = vmax.f32 %v561, 0.0
      %564 = vst [vmem:[%s305] sm:$0xff] %v562
      %565 = vst [vmem:[%s305 + $0x8] sm:$0xff] %v563
      %p566 = scmp.lt.s32.totalorder %s19, 1
      %s567 = scalar_select %p566, %s19, 1
      %s568 = smul.addr %s567, 2
      %s569 = smul.addr %s568, 8
      %s570 = scalar_lea.vmem %s8, %s569
      // Predicated region
      $region53: #{bottleneck_pallas.1} parent=51 // pred_check
        %p571 = pneg %p210
      $region54: #{bottleneck_pallas.1} parent=51 // pred_check_branch
        %573 = sbr.rel (%p571) target = $region56
      $region55: #{bottleneck_pallas.1} parent=51 // pred_region
        _
      $region56: #{bottleneck_pallas.1} parent=51 // pred_fallthru
        _
    $region52: #{bottleneck_pallas.1} parent=5 // pred_fallthru
      _
    %p574 = scmp.le.s32.totalorder 2, %s14
    // Predicated region
    $region57: #{bottleneck_pallas.1} parent=5 // pred_check
      %p575 = pneg %p574
    $region58: #{bottleneck_pallas.1} parent=5 // pred_check_branch
      %577 = sbr.rel (%p575) target = $region60
    $region59: #{bottleneck_pallas.1} parent=5 // pred_region
      %s578 = ssub.s32 %s14, 2
      // Predicated region
      $region61: #{bottleneck_pallas.1} parent=59 // pred_check
        %p579 = pneg %p216
      $region62: #{bottleneck_pallas.1} parent=59 // pred_check_branch
        %581 = sbr.rel (%p579) target = $region64
      $region63: #{bottleneck_pallas.1} parent=59 // pred_region
        %p582 = scmp.lt.s32.totalorder %s20, 1
        %s583 = scalar_select %p582, %s20, 1
        %s584 = smul.addr %s583, 2
        %s585 = smul.addr %s584, 8
        %s586 = scalar_lea.vmem %s8, %s585
      $region64: #{bottleneck_pallas.1} parent=59 // pred_fallthru
        _
    $region60: #{bottleneck_pallas.1} parent=5 // pred_fallthru
      _
  $region6: #{bottleneck_pallas.1} parent=0 // loop_footer
    %s18 = sadd.s32 1, %s14
  $region7: #{bottleneck_pallas.1} parent=0 // loop_footer_branch
    %13 = sbr.rel target = $region3
  $region8: #{bottleneck_pallas.1} parent=0 // loop_exit
    _

</llo_original>
